<compile_context>
chip_gen: v7x
topology: tpu7x:2x2x1
jax: 0.10.0
libtpu: 0.0.40
codegen_flags: <defaults>
</compile_context>

<pallas_src>
import math

import jax
import jax.numpy as jnp
from jax.experimental import pallas as pl
from jax.experimental.pallas import tpu as pltpu


def _round_up(x, m):
    return -(-x // m) * m


# ----------------------------------------------------------------------------
# Timestep embedding (tiny; plain JAX, matches the PyTorch helper)
# ----------------------------------------------------------------------------
def get_timestep_embedding(timesteps, embedding_dim, flip_sin_to_cos=False,
                           downscale_freq_shift=1.0, scale=1.0, max_period=10000):
    assert timesteps.ndim == 1, "Timesteps should be a 1d-array"
    half_dim = embedding_dim // 2
    exponent = -math.log(max_period) * jnp.arange(half_dim, dtype=jnp.float32)
    exponent = exponent / (half_dim - downscale_freq_shift)
    emb = jnp.exp(exponent)
    emb = timesteps[:, None].astype(jnp.float32) * emb[None, :]
    emb = scale * emb
    emb = jnp.concatenate([jnp.sin(emb), jnp.cos(emb)], axis=-1)
    if flip_sin_to_cos:
        emb = jnp.concatenate([emb[:, half_dim:], emb[:, :half_dim]], axis=-1)
    if embedding_dim % 2 == 1:
        emb = jnp.pad(emb, ((0, 0), (0, 1)))
    return emb


# ----------------------------------------------------------------------------
# One-time feature / hardware probes (cached; no per-call try/except)
# ----------------------------------------------------------------------------
_BUFFERED1_SUPPORTED = None


def _probe_buffered1():
    """Compile + run a tiny kernel whose constant operand is single-buffered via
    pl.Buffered(1).  If this JAX build rejects pipeline_mode on top-level BlockSpecs we
    fall back to default double-buffered constants (costs VMEM, never correctness)."""
    try:
        def k(x_ref, c_ref, o_ref):
            o_ref[...] = x_ref[...] + c_ref[...]

        fn = pl.pallas_call(
            k,
            out_shape=jax.ShapeDtypeStruct((16, 128), jnp.float32),
            grid_spec=pltpu.PrefetchScalarGridSpec(
                num_scalar_prefetch=0,
                grid=(2,),
                in_specs=[
                    pl.BlockSpec((8, 128), lambda i: (i, 0)),
                    pl.BlockSpec((8, 128), lambda i: (0, 0),
                                 pipeline_mode=pl.Buffered(1)),
                ],
                out_specs=pl.BlockSpec((8, 128), lambda i: (i, 0)),
            ),
        )
        jax.block_until_ready(fn(jnp.zeros((16, 128), jnp.float32),
                                 jnp.ones((8, 128), jnp.float32)))
        return True
    except Exception:
        return False


def _buffered1_supported():
    global _BUFFERED1_SUPPORTED
    if _BUFFERED1_SUPPORTED is None:
        _BUFFERED1_SUPPORTED = _probe_buffered1()
    return _BUFFERED1_SUPPORTED


def _vmem_capacity_bytes():
    try:
        return int(pltpu.get_tpu_info().vmem_capacity_bytes)
    except Exception:
        return 64 * 1024 * 1024          # conservative fallback (= v7x per-TC VMEM)


# ----------------------------------------------------------------------------
# Fused mlp_xt kernel with the channel-concat folded into split-W1 matmuls:
#   [mip | x] @ W1 + b1  ==  mip @ W1_top + x @ W1_bot + b1
#   -> QuickGELU -> @ W2 + b2 -> QuickGELU
# ----------------------------------------------------------------------------
def mlp_xt_kernel(mip_ref, x_ref, w1t_ref, w1b_ref, b1_ref, w2_ref, b2_ref, o_ref):
    # Inputs already in the compute dtype (bf16 on the default path); f32 accumulation.
    h = jnp.dot(mip_ref[...], w1t_ref[...], preferred_element_type=jnp.float32)
    h = h + jnp.dot(x_ref[...], w1b_ref[...], preferred_element_type=jnp.float32)
    h = h + b1_ref[...]
    h = h * jax.nn.sigmoid(1.702 * h)          # QuickGELU in f32 (EUP/VPU are filler here)

    h2 = jnp.dot(h.astype(w2_ref.dtype), w2_ref[...], preferred_element_type=jnp.float32)
    h2 = h2 + b2_ref[...]
    h2 = h2 * jax.nn.sigmoid(1.702 * h2)

    o_ref[...] = h2.astype(o_ref.dtype)        # lane-dense (tile_n, D) store


def mlp_xt_fused(mip2d, x2d, w1, b1, w2, b2, *, tile_n=512,
                 compute_dtype=jnp.bfloat16, out_dtype=None):
    """mip2d/x2d: (N, D) token halves; w1: (2D, D); w2: (D, D). Returns (N, D)."""
    n, d = x2d.shape
    assert mip2d.shape == (n, d)
    assert w1.shape == (2 * d, d) and w2.shape == (d, d)
    assert b1.shape == (d,) and b2.shape == (d,)
    if out_dtype is None:
        out_dtype = x2d.dtype

    in_isz = jnp.dtype(compute_dtype).itemsize
    out_isz = jnp.dtype(out_dtype).itemsize

    # Row tile: multiple of the sublane packing (16 for bf16, 8 for f32), clamped to the
    # problem size.  No jnp.pad / output slice: grid = cdiv(n, tile) and Pallas masks the
    # ragged tail block (rows are independent, so garbage padding rows never mix in).
    sub = 16 if in_isz < 4 else 8
    tile_n = _round_up(max(sub, min(tile_n, _round_up(n, sub))), sub)
    grid = (pl.cdiv(n, tile_n),)

    # Weights / tokens at rest in the compute dtype (bf16 halves DMA + VMEM; no-op if the
    # caller already stores them in that dtype).  Biases stay f32 (bias-add + GELU in f32).
    w1c = w1.astype(compute_dtype)
    w1_top, w1_bot = w1c[:d], w1c[d:]
    w2c = w2.astype(compute_dtype)
    b1r = b1.reshape(1, d).astype(jnp.float32)
    b2r = b2.reshape(1, d).astype(jnp.float32)
    mip_c = mip2d.astype(compute_dtype)
    x_c = x2d.astype(compute_dtype)

    use_buf1 = _buffered1_supported()
    const_kw = {"pipeline_mode": pl.Buffered(1)} if use_buf1 else {}

    in_specs = [
        pl.BlockSpec((tile_n, d), lambda i: (i, 0)),                  # mip tile (pipelined)
        pl.BlockSpec((tile_n, d), lambda i: (i, 0)),                  # x tile   (pipelined)
        pl.BlockSpec((d, d), lambda i: (0, 0), **const_kw),           # W1_top (resident)
        pl.BlockSpec((d, d), lambda i: (0, 0), **const_kw),           # W1_bot (resident)
        pl.BlockSpec((1, d), lambda i: (0, 0), **const_kw),           # b1
        pl.BlockSpec((d, d), lambda i: (0, 0), **const_kw),           # W2 (resident)
        pl.BlockSpec((1, d), lambda i: (0, 0), **const_kw),           # b2
    ]
    out_spec = pl.BlockSpec((tile_n, d), lambda i: (i, 0))            # lane-dense output

    # Cost / VMEM accounting with actual itemsizes.
    w_bytes = (w1_top.size + w1_bot.size + w2c.size) * in_isz
    b_bytes = (b1r.size + b2r.size) * 4
    flops = 6 * n * d * d                         # 4nd^2 (layer 1) + 2nd^2 (layer 2)
    transcendentals = 2 * n * d                   # two sigmoids per output element
    bytes_accessed = 2 * n * d * in_isz + w_bytes + b_bytes + n * d * out_isz

    w_buf = 1 if use_buf1 else 2                  # fallback double-buffers the weights
    vmem_est = (w_buf * (w_bytes + b_bytes)
                + 2 * 2 * tile_n * d * in_isz     # mip/x tiles, double-buffered
                + 2 * tile_n * d * out_isz        # out tile, double-buffered
                + 4 * tile_n * d * 4)             # f32 intermediates / casts
    vmem_cap = _vmem_capacity_bytes()
    # Clamp to ~85% of physical VMEM so Mosaic keeps scratch headroom (matters on v7x/64MiB).
    vmem_limit = int(min(max(2 * vmem_est, 32 * 1024 * 1024), int(0.85 * vmem_cap)))

    return pl.pallas_call(
        mlp_xt_kernel,
        out_shape=jax.ShapeDtypeStruct((n, d), out_dtype),
        grid_spec=pltpu.PrefetchScalarGridSpec(
            num_scalar_prefetch=0,
            grid=grid,
            in_specs=in_specs,
            out_specs=out_spec,
        ),
        compiler_params=pltpu.CompilerParams(
            # Rows are independent -> "parallel" lets v7x shard the row grid across its 2
            # TensorCores (each TC holds its own resident weight copy).  On v5e/v6e this is
            # a no-op.  TODO(synk): verify 2-TC sharding in an xprof trace; switch to
            # pltpu.CORE_PARALLEL if one TC sits idle on v7x.
            dimension_semantics=("parallel",),
            vmem_limit_bytes=vmem_limit,
        ),
        cost_estimate=pl.CostEstimate(
            flops=int(flops),
            transcendentals=int(transcendentals),
            bytes_accessed=int(bytes_accessed),
        ),
    )(mip_c, x_c, w1_top, w1_bot, b1r, w2c, b2r)


# ----------------------------------------------------------------------------
# NoisePredictV2 forward (Pallas-backed) and pure-JAX reference
# ----------------------------------------------------------------------------
def _mlp_xt_rows(x_wide, params):
    """Plain-JAX mlp_xt on a handful of rows (the B timestep tokens)."""
    def qgelu(v):
        return v * jax.nn.sigmoid(1.702 * v)
    h = qgelu(jnp.dot(x_wide, params["w1"]) + params["b1"])
    return qgelu(jnp.dot(h, params["w2"]) + params["b2"])


def noise_predict_v2_forward(x_features, t, mip_features, key_padding_mask, params,
                             *, tile_n=512, compute_dtype=jnp.bfloat16, out_dtype=None):
    b, s, d = x_features.shape

    # Heavy path: fused mlp_xt over the B*S [mip | x] tokens.  The channel concat is fused
    # into the kernel (W1 split into top/bottom halves), so the (B, S, 2D) tensor is never
    # materialized in HBM; the (B,S,D)->(B*S,D) reshape is a free dim collapse.
    tokens = mlp_xt_fused(
        mip_features.reshape(b * s, d), x_features.reshape(b * s, d),
        params["w1"], params["b1"], params["w2"], params["b2"],
        tile_n=tile_n, compute_dtype=compute_dtype, out_dtype=out_dtype)
    tokens = tokens.reshape(b, s, d)

    # Timestep token (B rows) handled by a tiny plain-JAX MLP; it and the padding mask are
    # only consumed by the ResidualAttentionBlock stack.
    temb = get_timestep_embedding(t, 2 * d)                                # (B, 2D)
    temb_tok = _mlp_xt_rows(temb, params).astype(tokens.dtype)             # (B, D)
    mip_x_t = jnp.concatenate([temb_tok[:, None, :], tokens], axis=-2)     # (B, S+1, D)

    timestep_padding_mask = jnp.zeros((b, 1), dtype=jnp.bool_)
    concat_key_padding_mask = jnp.concatenate(
        [timestep_padding_mask, key_padding_mask], axis=-1)                # (B, S+1)
    del concat_key_padding_mask  # consumed only by the (omitted) resblocks
    # TODO(synk): ResidualAttentionBlock (self-attention stack) is not defined in the
    # provided spec, so the n_layers resblock loop is omitted (equivalent to n_layers=0);
    # with no resblocks the prepended timestep token is dropped by the slice below and XLA
    # simplifies the dead concat.

    noise = mip_x_t[:, -s:, :]
    return noise


def noise_predict_v2_ref(x_features, t, mip_features, key_padding_mask, params):
    d = x_features.shape[-1]
    temb = get_timestep_embedding(t, 2 * d)[:, None, :]
    mip_x = jnp.concatenate([mip_features, x_features], axis=-1)
    mip_x_t = jnp.concatenate([temb, mip_x], axis=-2)

    def qgelu(v):
        return v * jax.nn.sigmoid(1.702 * v)

    def linear(v, w, bias):
        return jnp.einsum("bsd,de->bse", v, w,
                          precision=jax.lax.Precision.HIGHEST) + bias

    h = qgelu(linear(mip_x_t, params["w1"], params["b1"]))
    h = qgelu(linear(h, params["w2"], params["b2"]))
    return h[:, -x_features.shape[1]:, :]


# ----------------------------------------------------------------------------
# Demo / self-check
# ----------------------------------------------------------------------------
if __name__ == "__main__":
    key = jax.random.PRNGKey(0)
    B, S, attn_dim = 2, 16, 128          # small, lane-dense (attn_dim multiple of 128)
    D_in = 2 * attn_dim

    k1, k2, k3, k4, k5, k6 = jax.random.split(key, 6)
    x_features = jax.random.normal(k1, (B, S, attn_dim), dtype=jnp.float32)
    mip_features = jax.random.normal(k2, (B, S, attn_dim), dtype=jnp.float32)
    t = jnp.array([7.0, 421.0], dtype=jnp.float32)
    key_padding_mask = jnp.zeros((B, S), dtype=jnp.bool_)

    bound1 = 1.0 / math.sqrt(D_in)
    bound2 = 1.0 / math.sqrt(attn_dim)
    params = {
        "w1": jax.random.uniform(k3, (D_in, attn_dim), jnp.float32, -bound1, bound1),
        "b1": jax.random.uniform(k4, (attn_dim,), jnp.float32, -bound1, bound1),
        "w2": jax.random.uniform(k5, (attn_dim, attn_dim), jnp.float32, -bound2, bound2),
        "b2": jax.random.uniform(k6, (attn_dim,), jnp.float32, -bound2, bound2),
    }

    ref = noise_predict_v2_ref(x_features, t, mip_features, key_padding_mask, params)

    fwd = jax.jit(noise_predict_v2_forward,
                  static_argnames=("tile_n", "compute_dtype", "out_dtype"))

    # f32 compute path (tight tolerance); tile_n=8 -> multi-step pipelined grid at this size.
    out_f32 = jax.block_until_ready(
        fwd(x_features, t, mip_features, key_padding_mask, params,
            tile_n=8, compute_dtype=jnp.float32))
    assert out_f32.shape == (B, S, attn_dim)
    assert jnp.allclose(out_f32, ref, atol=1e-4, rtol=1e-4), "f32 path mismatch vs reference"

    # Default production path: bf16 tokens/weights at rest, f32 accumulation + f32 GELU.
    out_bf16 = jax.block_until_ready(
        fwd(x_features, t, mip_features, key_padding_mask, params))
    assert out_bf16.shape == (B, S, attn_dim)
    assert out_bf16.dtype == x_features.dtype
    assert jnp.allclose(out_bf16, ref, atol=1e-1, rtol=1e-1), "bf16 path mismatch vs reference"

    print("KERNEL_OK")
</pallas_src>

<mosaic_0001>
module attributes {stable_mosaic.version = 11 : i64} {
  func.func @mlp_xt_kernel(%arg0: i32, %arg1: memref<8x128xf32, #tpu.memory_space<vmem>>, %arg2: memref<8x128xf32, #tpu.memory_space<vmem>>, %arg3: memref<128x128xf32, #tpu.memory_space<vmem>>, %arg4: memref<128x128xf32, #tpu.memory_space<vmem>>, %arg5: memref<1x128xf32, #tpu.memory_space<vmem>>, %arg6: memref<128x128xf32, #tpu.memory_space<vmem>>, %arg7: memref<1x128xf32, #tpu.memory_space<vmem>>, %arg8: memref<8x128xf32, #tpu.memory_space<vmem>>) attributes {dimension_semantics = [#tpu.dimension_semantics<parallel>], iteration_bounds = array<i64: 4>, scalar_prefetch = 0 : i64, scratch_operands = 0 : i64, tpu.core_type = #tpu.core_type<tc>, window_params = [{transform_indices = @transform_0, window_bounds = array<i64: 8, 128>}, {transform_indices = @transform_1, window_bounds = array<i64: 8, 128>}, {pipeline_mode = #tpu.pipeline_mode<synchronous>, transform_indices = @transform_2, window_bounds = array<i64: 128, 128>}, {pipeline_mode = #tpu.pipeline_mode<synchronous>, transform_indices = @transform_3, window_bounds = array<i64: 128, 128>}, {pipeline_mode = #tpu.pipeline_mode<synchronous>, transform_indices = @transform_4, window_bounds = array<i64: 1, 128>}, {pipeline_mode = #tpu.pipeline_mode<synchronous>, transform_indices = @transform_5, window_bounds = array<i64: 128, 128>}, {pipeline_mode = #tpu.pipeline_mode<synchronous>, transform_indices = @transform_6, window_bounds = array<i64: 1, 128>}, {transform_indices = @transform_7, window_bounds = array<i64: 8, 128>}]} {
    %c0 = arith.constant 0 : index
    %c0_0 = arith.constant 0 : index
    %0 = vector.load %arg1[%c0, %c0_0] : memref<8x128xf32, #tpu.memory_space<vmem>>, vector<8x128xf32>
    %c0_1 = arith.constant 0 : index
    %c0_2 = arith.constant 0 : index
    %1 = vector.load %arg3[%c0_1, %c0_2] : memref<128x128xf32, #tpu.memory_space<vmem>>, vector<128x128xf32>
    %cst = arith.constant dense<0.000000e+00> : vector<8x128xf32>
    %2 = tpu.matmul %0, %1, %cst {dimension_numbers = #tpu.dot_dimension_numbers<[1], [0], [0], [1], [0, 0, 1, 1], [], []>} : vector<8x128xf32>, vector<128x128xf32>, vector<8x128xf32> -> vector<8x128xf32>
    %c0_3 = arith.constant 0 : index
    %c0_4 = arith.constant 0 : index
    %3 = vector.load %arg2[%c0_3, %c0_4] : memref<8x128xf32, #tpu.memory_space<vmem>>, vector<8x128xf32>
    %c0_5 = arith.constant 0 : index
    %c0_6 = arith.constant 0 : index
    %4 = vector.load %arg4[%c0_5, %c0_6] : memref<128x128xf32, #tpu.memory_space<vmem>>, vector<128x128xf32>
    %cst_7 = arith.constant dense<0.000000e+00> : vector<8x128xf32>
    %5 = tpu.matmul %3, %4, %cst_7 {dimension_numbers = #tpu.dot_dimension_numbers<[1], [0], [0], [1], [0, 0, 1, 1], [], []>} : vector<8x128xf32>, vector<128x128xf32>, vector<8x128xf32> -> vector<8x128xf32>
    %6 = arith.addf %2, %5 : vector<8x128xf32>
    %c0_8 = arith.constant 0 : index
    %c0_9 = arith.constant 0 : index
    %7 = vector.load %arg5[%c0_8, %c0_9] : memref<1x128xf32, #tpu.memory_space<vmem>>, vector<1x128xf32>
    %8 = vector.broadcast %7 : vector<1x128xf32> to vector<8x128xf32>
    %9 = arith.addf %6, %8 : vector<8x128xf32>
    %cst_10 = arith.constant 1.702000e+00 : f32
    %10 = vector.broadcast %cst_10 : f32 to vector<8x128xf32>
    %11 = arith.mulf %10, %9 : vector<8x128xf32>
    %12 = arith.negf %11 : vector<8x128xf32>
    %13 = math.exp %12 : vector<8x128xf32>
    %cst_11 = arith.constant 1.000000e+00 : f32
    %14 = vector.broadcast %cst_11 : f32 to vector<8x128xf32>
    %15 = arith.addf %14, %13 : vector<8x128xf32>
    %16 = arith.divf %14, %15 : vector<8x128xf32>
    %17 = arith.mulf %9, %16 : vector<8x128xf32>
    %c0_12 = arith.constant 0 : index
    %c0_13 = arith.constant 0 : index
    %18 = vector.load %arg6[%c0_12, %c0_13] : memref<128x128xf32, #tpu.memory_space<vmem>>, vector<128x128xf32>
    %cst_14 = arith.constant dense<0.000000e+00> : vector<8x128xf32>
    %19 = tpu.matmul %17, %18, %cst_14 {dimension_numbers = #tpu.dot_dimension_numbers<[1], [0], [0], [1], [0, 0, 1, 1], [], []>} : vector<8x128xf32>, vector<128x128xf32>, vector<8x128xf32> -> vector<8x128xf32>
    %c0_15 = arith.constant 0 : index
    %c0_16 = arith.constant 0 : index
    %20 = vector.load %arg7[%c0_15, %c0_16] : memref<1x128xf32, #tpu.memory_space<vmem>>, vector<1x128xf32>
    %21 = vector.broadcast %20 : vector<1x128xf32> to vector<8x128xf32>
    %22 = arith.addf %19, %21 : vector<8x128xf32>
    %cst_17 = arith.constant 1.702000e+00 : f32
    %23 = vector.broadcast %cst_17 : f32 to vector<8x128xf32>
    %24 = arith.mulf %23, %22 : vector<8x128xf32>
    %25 = arith.negf %24 : vector<8x128xf32>
    %26 = math.exp %25 : vector<8x128xf32>
    %cst_18 = arith.constant 1.000000e+00 : f32
    %27 = vector.broadcast %cst_18 : f32 to vector<8x128xf32>
    %28 = arith.addf %27, %26 : vector<8x128xf32>
    %29 = arith.divf %27, %28 : vector<8x128xf32>
    %30 = arith.mulf %22, %29 : vector<8x128xf32>
    %c0_19 = arith.constant 0 : index
    %c0_20 = arith.constant 0 : index
    %31 = vector.load %arg8[%c0_19, %c0_20] : memref<8x128xf32, #tpu.memory_space<vmem>>, vector<8x128xf32>
    tpu.vector_store %arg8[%c0_19, %c0_20], %30 {strides = array<i32>} : memref<8x128xf32, #tpu.memory_space<vmem>>, vector<8x128xf32>,
    return
  }
  func.func @transform_0(%arg0: i32) -> (i32, i32) {
    %c0_i32 = arith.constant 0 : i32
    %c0_i32_0 = arith.constant 0 : i32
    return %arg0, %c0_i32 : i32, i32
  }
  func.func @transform_1(%arg0: i32) -> (i32, i32) {
    %c0_i32 = arith.constant 0 : i32
    %c0_i32_0 = arith.constant 0 : i32
    return %arg0, %c0_i32 : i32, i32
  }
  func.func @transform_2(%arg0: i32) -> (i32, i32) {
    %c0_i32 = arith.constant 0 : i32
    %c0_i32_0 = arith.constant 0 : i32
    %c0_i32_1 = arith.constant 0 : i32
    return %c0_i32, %c0_i32_0 : i32, i32
  }
  func.func @transform_3(%arg0: i32) -> (i32, i32) {
    %c0_i32 = arith.constant 0 : i32
    %c0_i32_0 = arith.constant 0 : i32
    %c0_i32_1 = arith.constant 0 : i32
    return %c0_i32, %c0_i32_0 : i32, i32
  }
  func.func @transform_4(%arg0: i32) -> (i32, i32) {
    %c0_i32 = arith.constant 0 : i32
    %c0_i32_0 = arith.constant 0 : i32
    %c0_i32_1 = arith.constant 0 : i32
    return %c0_i32, %c0_i32_0 : i32, i32
  }
  func.func @transform_5(%arg0: i32) -> (i32, i32) {
    %c0_i32 = arith.constant 0 : i32
    %c0_i32_0 = arith.constant 0 : i32
    %c0_i32_1 = arith.constant 0 : i32
    return %c0_i32, %c0_i32_0 : i32, i32
  }
  func.func @transform_6(%arg0: i32) -> (i32, i32) {
    %c0_i32 = arith.constant 0 : i32
    %c0_i32_0 = arith.constant 0 : i32
    %c0_i32_1 = arith.constant 0 : i32
    return %c0_i32, %c0_i32_0 : i32, i32
  }
  func.func @transform_7(%arg0: i32) -> (i32, i32) {
    %c0_i32 = arith.constant 0 : i32
    %c0_i32_0 = arith.constant 0 : i32
    return %arg0, %c0_i32 : i32, i32
  }
}

</mosaic_0001>

<llo_original>
// kernel: noise_predict_v2_forward.1
$region0: #{noise_predict_v2_forward.1}
  #allocation0 [shape = 'u32[]', space=smem, size = 0x4, offset = 0x4, fixed_abs, tag = 'smem constant byte address 0x4 - core index']
  #allocation1 [shape = 'u32[144,128]{1,0:T(1,128)}', space=vmem, size = 0x12000, scoped, tag = 'internal scratch']
  %s0 = inlined_call_operand.vmem [shape: f32[32,128], index: 0, kind: input, shape index: {}]
  %s1 = inlined_call_operand.vmem [shape: f32[32,128], index: 1, kind: input, shape index: {}]
  %s2 = inlined_call_operand.vmem [shape: f32[128,128], index: 2, kind: input, shape index: {}]
  %s3 = inlined_call_operand.vmem [shape: f32[128,128], index: 3, kind: input, shape index: {}]
  %s4 = inlined_call_operand.vmem [shape: f32[1,128], index: 4, kind: input, shape index: {}]
  %s5 = inlined_call_operand.vmem [shape: f32[128,128], index: 5, kind: input, shape index: {}]
  %s6 = inlined_call_operand.vmem [shape: f32[1,128], index: 6, kind: input, shape index: {}]
  %s7 = inlined_call_operand.hbm [shape: f32[32,128], index: 7, kind: output, shape index: {}]
  %s8 = sld [smem:[#allocation0]]
  $region61: #{noise_predict_v2_forward.1} parent=0
    _
  %s10 = ssub.s32 1, %s8
  %s11 = scalar_select 0, %s10, %s8
  $region1: #{noise_predict_v2_forward.1} parent=0
    #allocation2 [shape = 'u8[8192]{0}', space=vmem, size = 0x2000, scoped, tag = 'output window, operand 0']
    #allocation3 [shape = 's32[2]{0}', space=sflag, size = 0x8, scoped, tag = 'scoped memory for noise_predict_v2_forward.1']
    %12 = vsyncpa [#allocation3], 0
    %s13 = scalar_lea.sflag [#allocation3], 1
    %14 = vsyncpa %s13, 0
    loop: start=0, step=1, limit=6
    $region2: #{noise_predict_v2_forward.1} parent=1 // loop_pre_header
      _
    $region3: #{noise_predict_v2_forward.1} parent=1 // loop_header
      %s16 = sphi 0, %s20
      %p17 = scmp.ge.s32.totalorder %s16, 6
      %s26 = sphi 0, %s28
      %s29 = sphi 0, %s26
      %s30 = sphi 0, %s29
      %s46 = sphi 0, %s30
      %s52 = sphi 0, %s54
      %s55 = sphi 0, %s52
      %s56 = sphi 0, %s55
      %s72 = sphi 0, %s56
      %s76 = sphi 0, %s76
      %s78 = sphi 0, %s76
      %s79 = sphi 0, %s78
      %s93 = sphi 0, %s79
      %s97 = sphi 0, %s97
      %s99 = sphi 0, %s97
      %s100 = sphi 0, %s99
      %s114 = sphi 0, %s100
      %s118 = sphi 0, %s118
      %s120 = sphi 0, %s118
      %s121 = sphi 0, %s120
      %s135 = sphi 0, %s121
      %s139 = sphi 0, %s139
      %s141 = sphi 0, %s139
      %s142 = sphi 0, %s141
      %s156 = sphi 0, %s142
      %s160 = sphi 0, %s160
      %s162 = sphi 0, %s160
      %s163 = sphi 0, %s162
      %s177 = sphi 0, %s163
      %s183 = sphi 0, %s185
      %s186 = sphi 0, %s183
      %s187 = sphi 0, %s186
      %s203 = sphi 0, %s187
    $region4: #{noise_predict_v2_forward.1} parent=1 // loop_header_branch
      %19 = sbr.rel (%p17) target = $region8
    $region5: #{noise_predict_v2_forward.1} parent=1 // loop_body
      %s21 = ssub.s32 %s16, 1
      %s22 = ssub.s32 %s16, 2
      %s23 = sadd.s32 %s16, 1
      %s24 = ssub.s32 %s16, %s23
      %p25 = scmp.eq.s32.totalorder %s24, 0
      %s27 = sadd.s32 %s26, 1
      %s28 = scalar_select %p25, %s26, %s27
      %p31 = pneg %p25
      %p32 = scmp.eq.s32.totalorder %s16, 3
      %p33 = por %p31, %p32
      %p34 = scmp.ne.s32.totalorder %s26, %s29
      %p35 = scmp.eq.s32.totalorder %s16, 0
      %p36 = por %p34, %p35
      %p37 = scmp.ne.s32.totalorder %s26, %s29
      %p38 = scmp.eq.s32.totalorder %s21, 3
      %p39 = por %p37, %p38
      %p40 = scmp.ne.s32.totalorder %s29, %s30
      %p41 = scmp.eq.s32.totalorder %s21, 0
      %p42 = por %p40, %p41
      %p43 = scmp.ne.s32.totalorder %s29, %s30
      %p44 = scmp.eq.s32.totalorder %s22, 3
      %p45 = por %p43, %p44
      %p47 = scmp.ne.s32.totalorder %s30, %s46
      %p48 = scmp.eq.s32.totalorder %s22, 0
      %p49 = por %p47, %p48
      %s50 = ssub.s32 %s16, %s23
      %p51 = scmp.eq.s32.totalorder %s50, 0
      %s53 = sadd.s32 %s52, 1
      %s54 = scalar_select %p51, %s52, %s53
      %p57 = pneg %p51
      %p58 = scmp.eq.s32.totalorder %s16, 3
      %p59 = por %p57, %p58
      %p60 = scmp.ne.s32.totalorder %s52, %s55
      %p61 = scmp.eq.s32.totalorder %s16, 0
      %p62 = por %p60, %p61
      %p63 = scmp.ne.s32.totalorder %s52, %s55
      %p64 = scmp.eq.s32.totalorder %s21, 3
      %p65 = por %p63, %p64
      %p66 = scmp.ne.s32.totalorder %s55, %s56
      %p67 = scmp.eq.s32.totalorder %s21, 0
      %p68 = por %p66, %p67
      %p69 = scmp.ne.s32.totalorder %s55, %s56
      %p70 = scmp.eq.s32.totalorder %s22, 3
      %p71 = por %p69, %p70
      %p73 = scmp.ne.s32.totalorder %s56, %s72
      %p74 = scmp.eq.s32.totalorder %s22, 0
      %p75 = por %p73, %p74
      %s77 = sadd.s32 %s76, 1
      %p80 = scmp.eq.s32.totalorder %s16, 3
      %p81 = scmp.ne.s32.totalorder %s76, %s78
      %p82 = scmp.eq.s32.totalorder %s16, 0
      %p83 = por %p81, %p82
      %p84 = scmp.ne.s32.totalorder %s76, %s78
      %p85 = scmp.eq.s32.totalorder %s21, 3
      %p86 = por %p84, %p85
      %p87 = scmp.ne.s32.totalorder %s78, %s79
      %p88 = scmp.eq.s32.totalorder %s21, 0
      %p89 = por %p87, %p88
      %p90 = scmp.ne.s32.totalorder %s78, %s79
      %p91 = scmp.eq.s32.totalorder %s22, 3
      %p92 = por %p90, %p91
      %p94 = scmp.ne.s32.totalorder %s79, %s93
      %p95 = scmp.eq.s32.totalorder %s22, 0
      %p96 = por %p94, %p95
      %s98 = sadd.s32 %s97, 1
      %p101 = scmp.eq.s32.totalorder %s16, 3
      %p102 = scmp.ne.s32.totalorder %s97, %s99
      %p103 = scmp.eq.s32.totalorder %s16, 0
      %p104 = por %p102, %p103
      %p105 = scmp.ne.s32.totalorder %s97, %s99
      %p106 = scmp.eq.s32.totalorder %s21, 3
      %p107 = por %p105, %p106
      %p108 = scmp.ne.s32.totalorder %s99, %s100
      %p109 = scmp.eq.s32.totalorder %s21, 0
      %p110 = por %p108, %p109
      %p111 = scmp.ne.s32.totalorder %s99, %s100
      %p112 = scmp.eq.s32.totalorder %s22, 3
      %p113 = por %p111, %p112
      %p115 = scmp.ne.s32.totalorder %s100, %s114
      %p116 = scmp.eq.s32.totalorder %s22, 0
      %p117 = por %p115, %p116
      %s119 = sadd.s32 %s118, 1
      %p122 = scmp.eq.s32.totalorder %s16, 3
      %p123 = scmp.ne.s32.totalorder %s118, %s120
      %p124 = scmp.eq.s32.totalorder %s16, 0
      %p125 = por %p123, %p124
      %p126 = scmp.ne.s32.totalorder %s118, %s120
      %p127 = scmp.eq.s32.totalorder %s21, 3
      %p128 = por %p126, %p127
      %p129 = scmp.ne.s32.totalorder %s120, %s121
      %p130 = scmp.eq.s32.totalorder %s21, 0
      %p131 = por %p129, %p130
      %p132 = scmp.ne.s32.totalorder %s120, %s121
      %p133 = scmp.eq.s32.totalorder %s22, 3
      %p134 = por %p132, %p133
      %p136 = scmp.ne.s32.totalorder %s121, %s135
      %p137 = scmp.eq.s32.totalorder %s22, 0
      %p138 = por %p136, %p137
      %s140 = sadd.s32 %s139, 1
      %p143 = scmp.eq.s32.totalorder %s16, 3
      %p144 = scmp.ne.s32.totalorder %s139, %s141
      %p145 = scmp.eq.s32.totalorder %s16, 0
      %p146 = por %p144, %p145
      %p147 = scmp.ne.s32.totalorder %s139, %s141
      %p148 = scmp.eq.s32.totalorder %s21, 3
      %p149 = por %p147, %p148
      %p150 = scmp.ne.s32.totalorder %s141, %s142
      %p151 = scmp.eq.s32.totalorder %s21, 0
      %p152 = por %p150, %p151
      %p153 = scmp.ne.s32.totalorder %s141, %s142
      %p154 = scmp.eq.s32.totalorder %s22, 3
      %p155 = por %p153, %p154
      %p157 = scmp.ne.s32.totalorder %s142, %s156
      %p158 = scmp.eq.s32.totalorder %s22, 0
      %p159 = por %p157, %p158
      %s161 = sadd.s32 %s160, 1
      %p164 = scmp.eq.s32.totalorder %s16, 3
      %p165 = scmp.ne.s32.totalorder %s160, %s162
      %p166 = scmp.eq.s32.totalorder %s16, 0
      %p167 = por %p165, %p166
      %p168 = scmp.ne.s32.totalorder %s160, %s162
      %p169 = scmp.eq.s32.totalorder %s21, 3
      %p170 = por %p168, %p169
      %p171 = scmp.ne.s32.totalorder %s162, %s163
      %p172 = scmp.eq.s32.totalorder %s21, 0
      %p173 = por %p171, %p172
      %p174 = scmp.ne.s32.totalorder %s162, %s163
      %p175 = scmp.eq.s32.totalorder %s22, 3
      %p176 = por %p174, %p175
      %p178 = scmp.ne.s32.totalorder %s163, %s177
      %p179 = scmp.eq.s32.totalorder %s22, 0
      %p180 = por %p178, %p179
      %s181 = ssub.s32 %s16, %s23
      %p182 = scmp.eq.s32.totalorder %s181, 0
      %s184 = sadd.s32 %s183, 1
      %s185 = scalar_select %p182, %s183, %s184
      %p188 = pneg %p182
      %p189 = scmp.eq.s32.totalorder %s16, 3
      %p190 = por %p188, %p189
      %p191 = scmp.ne.s32.totalorder %s183, %s186
      %p192 = scmp.eq.s32.totalorder %s16, 0
      %p193 = por %p191, %p192
      %p194 = scmp.ne.s32.totalorder %s183, %s186
      %p195 = scmp.eq.s32.totalorder %s21, 3
      %p196 = por %p194, %p195
      %p197 = scmp.ne.s32.totalorder %s186, %s187
      %p198 = scmp.eq.s32.totalorder %s21, 0
      %p199 = por %p197, %p198
      %p200 = scmp.ne.s32.totalorder %s186, %s187
      %p201 = scmp.eq.s32.totalorder %s22, 3
      %p202 = por %p200, %p201
      %p204 = scmp.ne.s32.totalorder %s187, %s203
      %p205 = scmp.eq.s32.totalorder %s22, 0
      %p206 = por %p204, %p205
      %p207 = scmp.le.s32.totalorder 1, %s16
      %p208 = scmp.lt.s32.totalorder %s16, 5
      %p209 = pnand %p207, %p208
      %p210 = pneg %p209
      // Predicated region
      $region9: #{noise_predict_v2_forward.1} parent=5 // pred_check
        _
      $region10: #{noise_predict_v2_forward.1} parent=5 // pred_check_branch
        %212 = sbr.rel (%p209) target = $region12
      $region11: #{noise_predict_v2_forward.1} parent=5 // pred_region
        %s213 = ssub.s32 %s16, 1
        // Predicated region
        $region13: #{noise_predict_v2_forward.1} parent=11 // pred_check
          %p214 = pneg %p89
        $region14: #{noise_predict_v2_forward.1} parent=11 // pred_check_branch
          %216 = sbr.rel (%p214) target = $region16
        $region15: #{noise_predict_v2_forward.1} parent=11 // pred_region
          _
        $region16: #{noise_predict_v2_forward.1} parent=11 // pred_fallthru
          _
        // Predicated region
        $region17: #{noise_predict_v2_forward.1} parent=11 // pred_check
          %p217 = pneg %p110
        $region18: #{noise_predict_v2_forward.1} parent=11 // pred_check_branch
          %219 = sbr.rel (%p217) target = $region20
        $region19: #{noise_predict_v2_forward.1} parent=11 // pred_region
          _
        $region20: #{noise_predict_v2_forward.1} parent=11 // pred_fallthru
          _
        // Predicated region
        $region21: #{noise_predict_v2_forward.1} parent=11 // pred_check
          %p220 = pneg %p131
        $region22: #{noise_predict_v2_forward.1} parent=11 // pred_check_branch
          %222 = sbr.rel (%p220) target = $region24
        $region23: #{noise_predict_v2_forward.1} parent=11 // pred_region
          _
        $region24: #{noise_predict_v2_forward.1} parent=11 // pred_fallthru
          _
        // Predicated region
        $region25: #{noise_predict_v2_forward.1} parent=11 // pred_check
          %p223 = pneg %p152
        $region26: #{noise_predict_v2_forward.1} parent=11 // pred_check_branch
          %225 = sbr.rel (%p223) target = $region28
        $region27: #{noise_predict_v2_forward.1} parent=11 // pred_region
          _
        $region28: #{noise_predict_v2_forward.1} parent=11 // pred_fallthru
          _
        // Predicated region
        $region29: #{noise_predict_v2_forward.1} parent=11 // pred_check
          %p226 = pneg %p173
        $region30: #{noise_predict_v2_forward.1} parent=11 // pred_check_branch
          %228 = sbr.rel (%p226) target = $region32
        $region31: #{noise_predict_v2_forward.1} parent=11 // pred_region
          _
        $region32: #{noise_predict_v2_forward.1} parent=11 // pred_fallthru
          _
      $region12: #{noise_predict_v2_forward.1} parent=5 // pred_fallthru
        _
      %p229 = scmp.lt.s32.totalorder %s16, 4
      // Predicated region
      $region33: #{noise_predict_v2_forward.1} parent=5 // pred_check
        %p230 = pneg %p229
      $region34: #{noise_predict_v2_forward.1} parent=5 // pred_check_branch
        %232 = sbr.rel (%p230) target = $region36
      $region35: #{noise_predict_v2_forward.1} parent=5 // pred_region
        // Predicated region
        $region37: #{noise_predict_v2_forward.1} parent=35 // pred_check
          %p233 = pneg %p36
        $region38: #{noise_predict_v2_forward.1} parent=35 // pred_check_branch
          %235 = sbr.rel (%p233) target = $region40
        $region39: #{noise_predict_v2_forward.1} parent=35 // pred_region
          %p236 = scmp.lt.s32.totalorder %s16, 3
          %s237 = scalar_select %p236, %s16, 3
          %s238 = smul.addr %s237, 8
          %s239 = scalar_lea.vmem %s0, %s238
        $region40: #{noise_predict_v2_forward.1} parent=35 // pred_fallthru
          _
        // Predicated region
        $region41: #{noise_predict_v2_forward.1} parent=35 // pred_check
          %p240 = pneg %p62
        $region42: #{noise_predict_v2_forward.1} parent=35 // pred_check_branch
          %242 = sbr.rel (%p240) target = $region44
        $region43: #{noise_predict_v2_forward.1} parent=35 // pred_region
          %p243 = scmp.lt.s32.totalorder %s16, 3
          %s244 = scalar_select %p243, %s16, 3
          %s245 = smul.addr %s244, 8
          %s246 = scalar_lea.vmem %s1, %s245
        $region44: #{noise_predict_v2_forward.1} parent=35 // pred_fallthru
          _
      $region36: #{noise_predict_v2_forward.1} parent=5 // pred_fallthru
        _
      %p247 = scmp.le.s32.totalorder 1, %s16
      %p248 = scmp.lt.s32.totalorder %s16, 5
      %p249 = pnand %p247, %p248
      %p250 = pneg %p249
      // Predicated region
      $region45: #{noise_predict_v2_forward.1} parent=5 // pred_check
        _
      $region46: #{noise_predict_v2_forward.1} parent=5 // pred_check_branch
        %252 = sbr.rel (%p249) target = $region48
      $region47: #{noise_predict_v2_forward.1} parent=5 // pred_region
        %s253 = ssub.s32 %s16, 1
        %p254 = scmp.lt.s32.totalorder %s21, 3
        %s255 = scalar_select %p254, %s21, 3
        %s256 = smul.addr %s255, 8
        %s257 = scalar_lea.vmem %s0, %s256
        %p258 = pneg %p42
        %p259 = pneg %p39
        %p260 = scmp.lt.s32.totalorder %s21, 3
        %s261 = scalar_select %p260, %s21, 3
        %s262 = smul.addr %s261, 8
        %s263 = scalar_lea.vmem %s1, %s262
        %p264 = pneg %p68
        %p265 = pneg %p65
        %p266 = pneg %p89
        %p267 = pneg %p86
        %p268 = pneg %p110
        %p269 = pneg %p107
        %p270 = pneg %p131
        %p271 = pneg %p128
        %p272 = pneg %p152
        %p273 = pneg %p149
        %p274 = pneg %p173
        %p275 = pneg %p170
        %p276 = pneg %p199
        %p277 = pneg %p196
        %s278 = sand.u32 %s186, 1
        %s279 = scalar_lea.sflag [#allocation3], %s278
        %s280 = sand.u32 %s186, 1
        %s281 = smul.addr %s280, 8
        %s282 = scalar_lea.vmem [#allocation2], %s281
        %p283 = scmp.lt.s32.totalorder %s21, 3
        %s284 = scalar_select %p283, %s21, 3
        %s285 = smul.addr %s284, 8
        %s286 = scalar_lea.vmem %s0, %s285
        %p287 = scmp.lt.s32.totalorder %s21, 3
        %s288 = scalar_select %p287, %s21, 3
        %s289 = smul.addr %s288, 8
        %s290 = scalar_lea.vmem %s1, %s289
        %v291 = vld [vmem:[%s286] sm:$0xff]
        %v292 = vld [vmem:[%s2] sm:$0xff]
        %v293 = vld [vmem:[%s2 + $0x8] sm:$0xff]
        %v294 = vld [vmem:[%s2 + $0x10] sm:$0xff]
        %v295 = vld [vmem:[%s2 + $0x18] sm:$0xff]
        %v296 = vld [vmem:[%s2 + $0x20] sm:$0xff]
        %v297 = vld [vmem:[%s2 + $0x28] sm:$0xff]
        %v298 = vld [vmem:[%s2 + $0x30] sm:$0xff]
        %v299 = vld [vmem:[%s2 + $0x38] sm:$0xff]
        %v300 = vld [vmem:[%s2 + $0x40] sm:$0xff]
        %v301 = vld [vmem:[%s2 + $0x48] sm:$0xff]
        %v302 = vld [vmem:[%s2 + $0x50] sm:$0xff]
        %v303 = vld [vmem:[%s2 + $0x58] sm:$0xff]
        %v304 = vld [vmem:[%s2 + $0x60] sm:$0xff]
        %v305 = vld [vmem:[%s2 + $0x68] sm:$0xff]
        %v306 = vld [vmem:[%s2 + $0x70] sm:$0xff]
        %v307 = vld [vmem:[%s2 + $0x78] sm:$0xff]
        %v308 = vld [vmem:[%s290] sm:$0xff]
        %v309 = vld [vmem:[%s3] sm:$0xff]
        %v310 = vld [vmem:[%s3 + $0x8] sm:$0xff]
        %v311 = vld [vmem:[%s3 + $0x10] sm:$0xff]
        %v312 = vld [vmem:[%s3 + $0x18] sm:$0xff]
        %v313 = vld [vmem:[%s3 + $0x20] sm:$0xff]
        %v314 = vld [vmem:[%s3 + $0x28] sm:$0xff]
        %v315 = vld [vmem:[%s3 + $0x30] sm:$0xff]
        %v316 = vld [vmem:[%s3 + $0x38] sm:$0xff]
        %v317 = vld [vmem:[%s3 + $0x40] sm:$0xff]
        %v318 = vld [vmem:[%s3 + $0x48] sm:$0xff]
        %v319 = vld [vmem:[%s3 + $0x50] sm:$0xff]
        %v320 = vld [vmem:[%s3 + $0x58] sm:$0xff]
        %v321 = vld [vmem:[%s3 + $0x60] sm:$0xff]
        %v322 = vld [vmem:[%s3 + $0x68] sm:$0xff]
        %v323 = vld [vmem:[%s3 + $0x70] sm:$0xff]
        %v324 = vld [vmem:[%s3 + $0x78] sm:$0xff]
        %325 = vmatprep.subr.mxu0 0.0
        %326 = vmatpush1.msra.mxu0 %v309
        %327 = vmatprep.subr.mxu0 0.0
        %328 = vmatpush1.msra.mxu0 %v310
        %329 = vmatprep.subr.mxu0 0.0
        %330 = vmatpush1.msra.mxu0 %v311
        %331 = vmatprep.subr.mxu0 0.0
        %332 = vmatpush1.msra.mxu0 %v312
        %333 = vmatprep.subr.mxu0 0.0
        %334 = vmatpush1.msra.mxu0 %v313
        %335 = vmatprep.subr.mxu0 0.0
        %336 = vmatpush1.msra.mxu0 %v314
        %337 = vmatprep.subr.mxu0 0.0
        %338 = vmatpush1.msra.mxu0 %v315
        %339 = vmatprep.subr.mxu0 0.0
        %340 = vmatpush1.msra.mxu0 %v316
        %341 = vmatprep.subr.mxu0 0.0
        %342 = vmatpush1.msra.mxu0 %v317
        %343 = vmatprep.subr.mxu0 0.0
        %344 = vmatpush1.msra.mxu0 %v318
        %345 = vmatprep.subr.mxu0 0.0
        %346 = vmatpush1.msra.mxu0 %v319
        %347 = vmatprep.subr.mxu0 0.0
        %348 = vmatpush1.msra.mxu0 %v320
        %349 = vmatprep.subr.mxu0 0.0
        %350 = vmatpush1.msra.mxu0 %v321
        %351 = vmatprep.subr.mxu0 0.0
        %352 = vmatpush1.msra.mxu0 %v322
        %353 = vmatprep.subr.mxu0 0.0
        %354 = vmatpush1.msra.mxu0 %v323
        %355 = vmatprep.subr.mxu0 0.0
        %356 = vmatpush1.msra.mxu0 %v324
        %357 = vmatprep.subr.mxu0 0.0
        %358 = vmatpush1.msra.mxu0 0.0
        %359 = vmatprep.subr.mxu0 0.0
        %360 = vmatpush1.msra.mxu0 0.0
        %361 = vmatprep.subr.mxu0 0.0
        %362 = vmatpush1.msra.mxu0 0.0
        %363 = vmatprep.subr.mxu0 0.0
        %364 = vmatpush1.msra.mxu0 0.0
        %365 = vmatprep.subr.mxu0 0.0
        %366 = vmatpush1.msra.mxu0 0.0
        %367 = vmatprep.subr.mxu0 0.0
        %368 = vmatpush1.msra.mxu0 0.0
        %369 = vmatprep.subr.mxu0 0.0
        %370 = vmatpush1.msra.mxu0 0.0
        %371 = vmatprep.subr.mxu0 0.0
        %372 = vmatpush1.msra.mxu0 0.0
        %373 = vmatprep.subr.mxu0 0.0
        %374 = vmatpush1.msra.mxu0 0.0
        %375 = vmatprep.subr.mxu0 0.0
        %376 = vmatpush1.msra.mxu0 0.0
        %377 = vmatprep.subr.mxu0 0.0
        %378 = vmatpush1.msra.mxu0 0.0
        %379 = vmatprep.subr.mxu0 0.0
        %380 = vmatpush1.msra.mxu0 0.0
        %381 = vmatprep.subr.mxu0 0.0
        %382 = vmatpush1.msra.mxu0 0.0
        %383 = vmatprep.subr.mxu0 0.0
        %384 = vmatpush1.msra.mxu0 0.0
        %385 = vmatprep.subr.mxu0 0.0
        %386 = vmatpush1.msra.mxu0 0.0
        %387 = vmatprep.subr.mxu0 0.0
        %388 = vmatpush1.msra.mxu0 0.0
        %389 = vmatprep.mubr.f32.mxu0 0.0
        %390 = vmatmul.mubr.f32.gmra.mrb[0].mxu0 %v308
        %v391 = vpop.f32.mrb[0].mxu0
        %v392 = vadd.f32 0.0, %v391
        %v393 = vpop.f32.mrb[0].mxu0
        %394 = vdwg.mxu0
        %395 = vmatprep.subr.mxu0 0.0
        %396 = vmatpush1.msra.mxu0 %v292
        %397 = vmatprep.subr.mxu0 0.0
        %398 = vmatpush1.msra.mxu0 %v293
        %399 = vmatprep.subr.mxu0 0.0
        %400 = vmatpush1.msra.mxu0 %v294
        %401 = vmatprep.subr.mxu0 0.0
        %402 = vmatpush1.msra.mxu0 %v295
        %403 = vmatprep.subr.mxu0 0.0
        %404 = vmatpush1.msra.mxu0 %v296
        %405 = vmatprep.subr.mxu0 0.0
        %406 = vmatpush1.msra.mxu0 %v297
        %407 = vmatprep.subr.mxu0 0.0
        %408 = vmatpush1.msra.mxu0 %v298
        %409 = vmatprep.subr.mxu0 0.0
        %410 = vmatpush1.msra.mxu0 %v299
        %411 = vmatprep.subr.mxu0 0.0
        %412 = vmatpush1.msra.mxu0 %v300
        %413 = vmatprep.subr.mxu0 0.0
        %414 = vmatpush1.msra.mxu0 %v301
        %415 = vmatprep.subr.mxu0 0.0
        %416 = vmatpush1.msra.mxu0 %v302
        %417 = vmatprep.subr.mxu0 0.0
        %418 = vmatpush1.msra.mxu0 %v303
        %419 = vmatprep.subr.mxu0 0.0
        %420 = vmatpush1.msra.mxu0 %v304
        %421 = vmatprep.subr.mxu0 0.0
        %422 = vmatpush1.msra.mxu0 %v305
        %423 = vmatprep.subr.mxu0 0.0
        %424 = vmatpush1.msra.mxu0 %v306
        %425 = vmatprep.subr.mxu0 0.0
        %426 = vmatpush1.msra.mxu0 %v307
        %427 = vmatprep.subr.mxu0 0.0
        %428 = vmatpush1.msra.mxu0 0.0
        %429 = vmatprep.subr.mxu0 0.0
        %430 = vmatpush1.msra.mxu0 0.0
        %431 = vmatprep.subr.mxu0 0.0
        %432 = vmatpush1.msra.mxu0 0.0
        %433 = vmatprep.subr.mxu0 0.0
        %434 = vmatpush1.msra.mxu0 0.0
        %435 = vmatprep.subr.mxu0 0.0
        %436 = vmatpush1.msra.mxu0 0.0
        %437 = vmatprep.subr.mxu0 0.0
        %438 = vmatpush1.msra.mxu0 0.0
        %439 = vmatprep.subr.mxu0 0.0
        %440 = vmatpush1.msra.mxu0 0.0
        %441 = vmatprep.subr.mxu0 0.0
        %442 = vmatpush1.msra.mxu0 0.0
        %443 = vmatprep.subr.mxu0 0.0
        %444 = vmatpush1.msra.mxu0 0.0
        %445 = vmatprep.subr.mxu0 0.0
        %446 = vmatpush1.msra.mxu0 0.0
        %447 = vmatprep.subr.mxu0 0.0
        %448 = vmatpush1.msra.mxu0 0.0
        %449 = vmatprep.subr.mxu0 0.0
        %450 = vmatpush1.msra.mxu0 0.0
        %451 = vmatprep.subr.mxu0 0.0
        %452 = vmatpush1.msra.mxu0 0.0
        %453 = vmatprep.subr.mxu0 0.0
        %454 = vmatpush1.msra.mxu0 0.0
        %455 = vmatprep.subr.mxu0 0.0
        %456 = vmatpush1.msra.mxu0 0.0
        %457 = vmatprep.subr.mxu0 0.0
        %458 = vmatpush1.msra.mxu0 0.0
        %459 = vmatprep.mubr.f32.mxu0 0.0
        %460 = vmatmul.mubr.f32.gmra.mrb[0].mxu0 %v291
        %v461 = vpop.f32.mrb[0].mxu0
        %v462 = vadd.f32 %v392, %v461
        %v463 = vpop.f32.mrb[0].mxu0
        %464 = vdwg.mxu0
        %v465 = vld [vmem:[%s4] sm:$0x1]
        %v467 = vlaneseq
        %v468 = vshrl.u32 %v467, 7
        %v469 = vsub.s32 0, %v468
        %v470 = vrot.slane %v465, %v469
        %v472 = vadd.f32 %v462, %v470
        %v473 = vmul.f32 %v472, 1.702
        %v474 = vxor.u32 %v473, 2147483648
        %v475 = vmul.f32 %v474, 1.442695
        %v476 = vpow.pop %v475
        %v477 = vadd.f32 %v476, 1.0
        %v478 = vrcp.pop %v477
        %v479 = vmul.f32 1.0, %v478
        %v480 = vmul.f32 %v472, %v479
        %v481 = vld [vmem:[%s5] sm:$0xff]
        %v482 = vld [vmem:[%s5 + $0x8] sm:$0xff]
        %v483 = vld [vmem:[%s5 + $0x10] sm:$0xff]
        %v484 = vld [vmem:[%s5 + $0x18] sm:$0xff]
        %v485 = vld [vmem:[%s5 + $0x20] sm:$0xff]
        %v486 = vld [vmem:[%s5 + $0x28] sm:$0xff]
        %v487 = vld [vmem:[%s5 + $0x30] sm:$0xff]
        %v488 = vld [vmem:[%s5 + $0x38] sm:$0xff]
        %v489 = vld [vmem:[%s5 + $0x40] sm:$0xff]
        %v490 = vld [vmem:[%s5 + $0x48] sm:$0xff]
        %v491 = vld [vmem:[%s5 + $0x50] sm:$0xff]
        %v492 = vld [vmem:[%s5 + $0x58] sm:$0xff]
        %v493 = vld [vmem:[%s5 + $0x60] sm:$0xff]
        %v494 = vld [vmem:[%s5 + $0x68] sm:$0xff]
        %v495 = vld [vmem:[%s5 + $0x70] sm:$0xff]
        %v496 = vld [vmem:[%s5 + $0x78] sm:$0xff]
        %v497 = vld [vmem:[%s6] sm:$0x1]
        %v499 = vlaneseq
        %v500 = vshrl.u32 %v499, 7
        %v501 = vsub.s32 0, %v500
        %v502 = vrot.slane %v497, %v501
        %504 = vmatprep.subr.mxu0 0.0
        %505 = vmatpush1.msra.mxu0 %v481
        %506 = vmatprep.subr.mxu0 0.0
        %507 = vmatpush1.msra.mxu0 %v482
        %508 = vmatprep.subr.mxu0 0.0
        %509 = vmatpush1.msra.mxu0 %v483
        %510 = vmatprep.subr.mxu0 0.0
        %511 = vmatpush1.msra.mxu0 %v484
        %512 = vmatprep.subr.mxu0 0.0
        %513 = vmatpush1.msra.mxu0 %v485
        %514 = vmatprep.subr.mxu0 0.0
        %515 = vmatpush1.msra.mxu0 %v486
        %516 = vmatprep.subr.mxu0 0.0
        %517 = vmatpush1.msra.mxu0 %v487
        %518 = vmatprep.subr.mxu0 0.0
        %519 = vmatpush1.msra.mxu0 %v488
        %520 = vmatprep.subr.mxu0 0.0
        %521 = vmatpush1.msra.mxu0 %v489
        %522 = vmatprep.subr.mxu0 0.0
        %523 = vmatpush1.msra.mxu0 %v490
        %524 = vmatprep.subr.mxu0 0.0
        %525 = vmatpush1.msra.mxu0 %v491
        %526 = vmatprep.subr.mxu0 0.0
        %527 = vmatpush1.msra.mxu0 %v492
        %528 = vmatprep.subr.mxu0 0.0
        %529 = vmatpush1.msra.mxu0 %v493
        %530 = vmatprep.subr.mxu0 0.0
        %531 = vmatpush1.msra.mxu0 %v494
        %532 = vmatprep.subr.mxu0 0.0
        %533 = vmatpush1.msra.mxu0 %v495
        %534 = vmatprep.subr.mxu0 0.0
        %535 = vmatpush1.msra.mxu0 %v496
        %536 = vmatprep.subr.mxu0 0.0
        %537 = vmatpush1.msra.mxu0 0.0
        %538 = vmatprep.subr.mxu0 0.0
        %539 = vmatpush1.msra.mxu0 0.0
        %540 = vmatprep.subr.mxu0 0.0
        %541 = vmatpush1.msra.mxu0 0.0
        %542 = vmatprep.subr.mxu0 0.0
        %543 = vmatpush1.msra.mxu0 0.0
        %544 = vmatprep.subr.mxu0 0.0
        %545 = vmatpush1.msra.mxu0 0.0
        %546 = vmatprep.subr.mxu0 0.0
        %547 = vmatpush1.msra.mxu0 0.0
        %548 = vmatprep.subr.mxu0 0.0
        %549 = vmatpush1.msra.mxu0 0.0
        %550 = vmatprep.subr.mxu0 0.0
        %551 = vmatpush1.msra.mxu0 0.0
        %552 = vmatprep.subr.mxu0 0.0
        %553 = vmatpush1.msra.mxu0 0.0
        %554 = vmatprep.subr.mxu0 0.0
        %555 = vmatpush1.msra.mxu0 0.0
        %556 = vmatprep.subr.mxu0 0.0
        %557 = vmatpush1.msra.mxu0 0.0
        %558 = vmatprep.subr.mxu0 0.0
        %559 = vmatpush1.msra.mxu0 0.0
        %560 = vmatprep.subr.mxu0 0.0
        %561 = vmatpush1.msra.mxu0 0.0
        %562 = vmatprep.subr.mxu0 0.0
        %563 = vmatpush1.msra.mxu0 0.0
        %564 = vmatprep.subr.mxu0 0.0
        %565 = vmatpush1.msra.mxu0 0.0
        %566 = vmatprep.subr.mxu0 0.0
        %567 = vmatpush1.msra.mxu0 0.0
        %568 = vmatprep.mubr.f32.mxu0 0.0
        %569 = vmatmul.mubr.f32.gmra.mrb[0].mxu0 %v480
        %v570 = vpop.f32.mrb[0].mxu0
        %v571 = vadd.f32 %v502, %v570
        %v572 = vpop.f32.mrb[0].mxu0
        %573 = vdwg.mxu0
        %v574 = vmul.f32 %v571, 1.702
        %v575 = vxor.u32 %v574, 2147483648
        %v576 = vmul.f32 %v575, 1.442695
        %v577 = vpow.pop %v576
        %v578 = vadd.f32 %v577, 1.0
        %v579 = vrcp.pop %v578
        %v580 = vmul.f32 1.0, %v579
        %v581 = vmul.f32 %v571, %v580
        %582 = vst [vmem:[%s282] sm:$0xff] %v581
        %s583 = sand.u32 %s186, 1
        %s584 = scalar_lea.sflag [#allocation3], %s583
        %s585 = sand.u32 %s186, 1
        %s586 = smul.addr %s585, 8
        %s587 = scalar_lea.vmem [#allocation2], %s586
        // Predicated region
        $region49: #{noise_predict_v2_forward.1} parent=47 // pred_check
          %p588 = pneg %p196
        $region50: #{noise_predict_v2_forward.1} parent=47 // pred_check_branch
          %590 = sbr.rel (%p588) target = $region52
        $region51: #{noise_predict_v2_forward.1} parent=47 // pred_region
          %s592 = ssub.s32 128, 128
          %593 = vsyncadd %s584, %s592
          %s594 = smul.addr %s21, 128
          %s595 = scalar_lea.hbm %s7, %s594
          %s597 = sshll.u32 %s587, 4
          %s598 = int_to_ptr.vmem [resolvable:$true] %s597
          %600 = dma.vmem_to_hbm [thread:$0]  %s598, 128, %s595, %s584
        $region52: #{noise_predict_v2_forward.1} parent=47 // pred_fallthru
          _
      $region48: #{noise_predict_v2_forward.1} parent=5 // pred_fallthru
        _
      %p601 = scmp.le.s32.totalorder 2, %s16
      // Predicated region
      $region53: #{noise_predict_v2_forward.1} parent=5 // pred_check
        %p602 = pneg %p601
      $region54: #{noise_predict_v2_forward.1} parent=5 // pred_check_branch
        %604 = sbr.rel (%p602) target = $region56
      $region55: #{noise_predict_v2_forward.1} parent=5 // pred_region
        %s605 = ssub.s32 %s16, 2
        // Predicated region
        $region57: #{noise_predict_v2_forward.1} parent=55 // pred_check
          %p606 = pneg %p202
        $region58: #{noise_predict_v2_forward.1} parent=55 // pred_check_branch
          %608 = sbr.rel (%p606) target = $region60
        $region59: #{noise_predict_v2_forward.1} parent=55 // pred_region
          %s609 = sand.u32 %s187, 1
          %s610 = scalar_lea.sflag [#allocation3], %s609
          %s611 = sand.u32 %s187, 1
          %s612 = smul.addr %s611, 8
          %s613 = scalar_lea.vmem [#allocation2], %s612
          %614 = dma.done %s610, 128
        $region60: #{noise_predict_v2_forward.1} parent=55 // pred_fallthru
          _
      $region56: #{noise_predict_v2_forward.1} parent=5 // pred_fallthru
        _
    $region6: #{noise_predict_v2_forward.1} parent=1 // loop_footer
      %s20 = sadd.s32 1, %s16
    $region7: #{noise_predict_v2_forward.1} parent=1 // loop_footer_branch
      %15 = sbr.rel target = $region3
    $region8: #{noise_predict_v2_forward.1} parent=1 // loop_exit
      _
    %615 = vsyncpa [#allocation3], 1
    %s616 = scalar_lea.sflag [#allocation3], 1
    %617 = vsyncpa %s616, 1

</llo_original>
